<compile_context>
chip_gen: v5e
topology: v5e:2x2
jax: 0.10.0
libtpu: 0.0.40
codegen_flags: <defaults>
</compile_context>

<pallas_src>
import functools
import numpy as np

import jax
import jax.numpy as jnp
from jax.experimental import pallas as pl
from jax.experimental.pallas import tpu as pltpu


def _psg_kernel(a_ref, w_ref, o_ref):
    """One fused MXU matmul per batch element.

    a_ref: (1, K, L)    bf16  im2col activations (K = n_taps * Cin, L lane-dense).
    w_ref: (Cout, K)    bf16  all three convs' taps stacked along K (VMEM-resident).
    o_ref: (1, Cout, L) f32   output, already in NCHW-flat order.
    """
    # f32 accumulation on the MXU; output stays f32 (cast here to bf16 if the
    # consumer tolerates it -- halves store volume at production sizes).
    o_ref[0] = jnp.dot(w_ref[...], a_ref[0], preferred_element_type=jnp.float32)


def _pack_dense(w, G, cin, cout, KH, KW):
    """(Cout, Cin//G, KH, KW) grouped weight -> dense (KH*KW, Cin, Cout)
    block-diagonal weight (grouped conv == dense conv with zero off-blocks).
    TODO(synk): for production channel counts keep per-group K segments (group
    axis on the grid) instead of densifying -- avoids the Gp-x FLOP/VMEM
    blow-up and keeps K near the 128/256 MXU depth (also fixes the nearly
    empty second K-pass on v5e's 128-deep MXU)."""
    cout_g, cin_g = cout // G, cin // G
    wr = jnp.transpose(w.reshape(G, cout_g, cin_g, KH, KW), (0, 3, 4, 2, 1))
    dense = jnp.zeros((KH * KW, cin, cout), jnp.float32)
    for g in range(G):
        dense = dense.at[:, g * cin_g:(g + 1) * cin_g,
                         g * cout_g:(g + 1) * cout_g].set(
            wr[g].reshape(KH * KW, cin_g, cout_g))
    return dense


def _merge_inv_perm(cin, groups):
    """Channel permutation p_inv with conv(x_merge, W) == conv(x, W[:, p_inv, :])."""
    cg = cin // groups
    half = (cg + 1) // 2                 # torch.chunk(2) gives the ceil-half first
    perm = []
    for g in range(groups):
        base = g * cg
        perm.extend(range(base + half, base + cg))
        perm.extend(range(base, base + half))
    perm = np.asarray(perm)              # x_merge[:, i] = x[:, perm[i]]
    return np.argsort(perm)              # inverse permutation


@functools.partial(jax.jit, static_argnames=("groups", "parts", "dilation",
                                             "padding", "kernel_size"))
def psg_conv2d(x_nchw, w_gw, w_shift, w_conv, *, groups=1, parts=4,
               dilation=1, padding=1, kernel_size=3):
    """PSGConv2d forward: gwconv(x) + conv(x) + gwconv_shift(x_merge), NCHW in/out."""
    N, Cin, H, W = x_nchw.shape
    Cout = w_gw.shape[0]
    KH = KW = kernel_size
    Gp = groups * parts

    # ---- weight packing (f32 host-side glue, cast to bf16 at the end) ------
    dense_gw = _pack_dense(w_gw.astype(jnp.float32), Gp, Cin, Cout, KH, KW)
    dense_sh = _pack_dense(w_shift.astype(jnp.float32), Gp, Cin, Cout, KH, KW)
    dense_cv = _pack_dense(w_conv.astype(jnp.float32), groups, Cin, Cout, KH, KW)

    # Fold the x_merge channel-half swap into the shift weights: only one
    # activation tensor is ever built / DMA'd.
    dense_sh = dense_sh[:, _merge_inv_perm(Cin, groups), :]

    # Group every tap of every conv by its (row, col) offset into the shared
    # P-padded image; taps landing on the same offset simply add their weights.
    P = max(2 * dilation, padding)
    taps = {}
    for dense, p, d in ((dense_gw, dilation, dilation),
                        (dense_sh, 2 * dilation, 2 * dilation),
                        (dense_cv, padding, 1)):
        for kh in range(KH):
            for kw in range(KW):
                r, s = P - p + kh * d, P - p + kw * d
                w_tap = dense[kh * KW + kw]                  # (Cin, Cout)
                taps[(r, s)] = taps[(r, s)] + w_tap if (r, s) in taps else w_tap
    rs_list = sorted(taps)
    w_pack = jnp.concatenate([taps[rs] for rs in rs_list], axis=0)   # (K, Cout)
    w_pack = w_pack.T.astype(jnp.bfloat16)                           # (Cout, K)
    K = len(rs_list) * Cin                                           # 17 * Cin

    # ---- im2col RHS: built ONCE by XLA from static slices of one padded x ---
    # Each tap (r, s) reads x_pad[:, :, r:r+H, s:s+W]; flattening (H, W) gives
    # a lane-dense contraction RHS and the output comes out directly in NCHW.
    lout = H * W
    lpad = -(-lout // 128) * 128          # lane-dense stores (no-op for 16x16)
    x_pad = jnp.pad(x_nchw, ((0, 0), (0, 0), (P, P), (P, P)))
    a = jnp.concatenate([x_pad[:, :, r:r + H, s:s + W] for (r, s) in rs_list],
                        axis=1)                                      # (N, K, H, W)
    a = a.reshape(N, K, lout).astype(jnp.bfloat16)
    if lpad != lout:
        a = jnp.pad(a, ((0, 0), (0, 0), (0, lpad - lout)))

    out_flat = pl.pallas_call(
        _psg_kernel,
        out_shape=jax.ShapeDtypeStruct((N, Cout, lpad), jnp.float32),
        grid=(N,),                        # 2 steps: minimal overhead on v5e/v6e,
        in_specs=[                        # one per TensorCore on v7x.
            pl.BlockSpec((1, K, lpad), lambda n: (n, 0, 0)),
            # Constant block index -> packed weights stay resident in VMEM.
            pl.BlockSpec((Cout, K), lambda n: (0, 0)),
        ],
        out_specs=pl.BlockSpec((1, Cout, lpad), lambda n: (n, 0, 0)),
        compiler_params=pltpu.CompilerParams(
            dimension_semantics=("parallel",)),
    )(a, w_pack)

    # Output is already NCHW-ordered; just strip lane padding and reshape.
    return out_flat[..., :lout].reshape(N, Cout, H, W)


if __name__ == "__main__":
    # PSGConv2d(in_channels=8, out_channels=8, kernel_size=3, stride=1,
    #           padding=1, dilation=1, groups=1, parts=4, bias=False)
    N, Cin, Cout, H, W = 2, 8, 8, 16, 16
    groups, parts, k, padding, dilation = 1, 4, 3, 1, 1
    Gp = groups * parts

    key = jax.random.PRNGKey(0)
    k1, k2, k3, k4 = jax.random.split(key, 4)
    x = jax.random.normal(k1, (N, Cin, H, W), jnp.float32)
    w_gw = 0.1 * jax.random.normal(k2, (Cout, Cin // Gp, k, k), jnp.float32)
    w_shift = 0.1 * jax.random.normal(k3, (Cout, Cin // Gp, k, k), jnp.float32)
    w_conv = 0.1 * jax.random.normal(k4, (Cout, Cin // groups, k, k), jnp.float32)

    # Structured sparsity from __init__: conv.weight.data[mask] = 0.
    # TODO(synk): the backward gradient hook is training-only and has no forward effect.
    _in = Cin // Gp
    _out = Cout // Gp
    mask = np.zeros((Cout, Cin // groups, k, k), dtype=bool)
    for i in range(parts):
        for j in range(groups):
            o0 = (i + j * groups) * _out
            mask[o0:o0 + _out, i * _in:(i + 1) * _in] = True
            o1 = ((i + parts // 2) % parts + j * groups) * _out
            mask[o1:o1 + _out, i * _in:(i + 1) * _in] = True
    w_conv = jnp.where(jnp.asarray(mask), 0.0, w_conv)

    out = psg_conv2d(x, w_gw, w_shift, w_conv, groups=groups, parts=parts,
                     dilation=dilation, padding=padding, kernel_size=k)
    out = jax.block_until_ready(out)

    # Reference (plain XLA convs in f32) to validate the Pallas kernel.
    def ref_conv(z, w, G, p, d):
        return jax.lax.conv_general_dilated(
            z, w, window_strides=(1, 1), padding=[(p, p), (p, p)],
            rhs_dilation=(d, d), dimension_numbers=('NCHW', 'OIHW', 'NCHW'),
            feature_group_count=G, precision=jax.lax.Precision.HIGHEST)

    chunks = jnp.split(x, groups, axis=1)
    x_merge = jnp.concatenate(
        [jnp.concatenate([c[:, c.shape[1] // 2:], c[:, :c.shape[1] // 2]], axis=1)
         for c in chunks], axis=1)
    ref = (ref_conv(x, w_gw, Gp, dilation, dilation)
           + ref_conv(x, w_conv, groups, padding, 1)
           + ref_conv(x_merge, w_shift, Gp, 2 * dilation, 2 * dilation))

    np.testing.assert_allclose(np.asarray(out), np.asarray(ref),
                               atol=2e-2, rtol=2e-2)
    print("KERNEL_OK")
</pallas_src>

<mosaic_0001>
module attributes {stable_mosaic.version = 11 : i64} {
  func.func @_psg_kernel(%arg0: i32, %arg1: memref<1x136x256xbf16, #tpu.memory_space<vmem>>, %arg2: memref<8x136xbf16, #tpu.memory_space<vmem>>, %arg3: memref<1x8x256xf32, #tpu.memory_space<vmem>>) attributes {dimension_semantics = [#tpu.dimension_semantics<parallel>], iteration_bounds = array<i64: 2>, scalar_prefetch = 0 : i64, scratch_operands = 0 : i64, tpu.core_type = #tpu.core_type<tc>, window_params = [{transform_indices = @transform_0, window_bounds = array<i64: 1, 136, 256>}, {pipeline_mode = #tpu.pipeline_mode<synchronous>, transform_indices = @transform_1, window_bounds = array<i64: 8, 136>}, {transform_indices = @transform_2, window_bounds = array<i64: 1, 8, 256>}]} {
    %c0 = arith.constant 0 : index
    %c0_0 = arith.constant 0 : index
    %0 = vector.load %arg2[%c0, %c0_0] : memref<8x136xbf16, #tpu.memory_space<vmem>>, vector<8x136xbf16>
    %c0_1 = arith.constant 0 : index
    %c0_2 = arith.constant 0 : index
    %c0_3 = arith.constant 0 : index
    %1 = vector.load %arg1[%c0_1, %c0_2, %c0_3] : memref<1x136x256xbf16, #tpu.memory_space<vmem>>, vector<1x136x256xbf16>
    %2 = vector.shape_cast %1 : vector<1x136x256xbf16> to vector<136x256xbf16>
    %cst = arith.constant dense<0.000000e+00> : vector<8x256xf32>
    %3 = tpu.matmul %0, %2, %cst {dimension_numbers = #tpu.dot_dimension_numbers<[1], [0], [0], [1], [0, 0, 1, 1], [], []>} : vector<8x136xbf16>, vector<136x256xbf16>, vector<8x256xf32> -> vector<8x256xf32>
    %c0_4 = arith.constant 0 : index
    %c0_5 = arith.constant 0 : index
    %c0_6 = arith.constant 0 : index
    %4 = vector.load %arg3[%c0_4, %c0_5, %c0_6] : memref<1x8x256xf32, #tpu.memory_space<vmem>>, vector<1x8x256xf32>
    %5 = vector.shape_cast %4 : vector<1x8x256xf32> to vector<8x256xf32>
    %6 = vector.shape_cast %3 : vector<8x256xf32> to vector<1x8x256xf32>
    tpu.vector_store %arg3[%c0_4, %c0_5, %c0_6], %6 {strides = array<i32>} : memref<1x8x256xf32, #tpu.memory_space<vmem>>, vector<1x8x256xf32>,
    return
  }
  func.func @transform_0(%arg0: i32) -> (i32, i32, i32) {
    %c0_i32 = arith.constant 0 : i32
    %c0_i32_0 = arith.constant 0 : i32
    %c0_i32_1 = arith.constant 0 : i32
    return %arg0, %c0_i32, %c0_i32_0 : i32, i32, i32
  }
  func.func @transform_1(%arg0: i32) -> (i32, i32) {
    %c0_i32 = arith.constant 0 : i32
    %c0_i32_0 = arith.constant 0 : i32
    %c0_i32_1 = arith.constant 0 : i32
    return %c0_i32, %c0_i32_0 : i32, i32
  }
  func.func @transform_2(%arg0: i32) -> (i32, i32, i32) {
    %c0_i32 = arith.constant 0 : i32
    %c0_i32_0 = arith.constant 0 : i32
    %c0_i32_1 = arith.constant 0 : i32
    return %arg0, %c0_i32, %c0_i32_0 : i32, i32, i32
  }
}

</mosaic_0001>

<llo_original>
// kernel: psg_conv2d.1
$region0: #{psg_conv2d.1}
  #allocation0 [shape = 'u32[]', space=smem, size = 0x4, offset = 0x4, fixed_abs, tag = 'smem constant byte address 0x4 - core index']
  #allocation1 [shape = 'u32[72,128]{1,0:T(1,128)}', space=vmem, size = 0x9000, scoped, tag = 'internal scratch']
  %s0 = inlined_call_operand.vmem [shape: bf16[2,136,256], index: 0, kind: input, shape index: {}]
  %s1 = inlined_call_operand.vmem [shape: bf16[8,136], index: 1, kind: input, shape index: {}]
  %s2 = inlined_call_operand.vmem [shape: f32[2,8,256], index: 2, kind: output, shape index: {}]
  %s3 = sld [smem:[#allocation0]]
  $region41: #{psg_conv2d.1} parent=0
    _
  %s5 = ssub.s32 1, %s3
  %s6 = scalar_select 0, %s5, %s3
  loop: start=0, step=1, limit=4
  $region2: #{psg_conv2d.1} parent=0 // loop_pre_header
    _
  $region3: #{psg_conv2d.1} parent=0 // loop_header
    %s8 = sphi 0, %s12
    %p9 = scmp.ge.s32.totalorder %s8, 4
    %s18 = sphi 0, %s20
    %s21 = sphi 0, %s18
    %s22 = sphi 0, %s21
    %s38 = sphi 0, %s22
    %s42 = sphi 0, %s42
    %s44 = sphi 0, %s42
    %s45 = sphi 0, %s44
    %s59 = sphi 0, %s45
    %s65 = sphi 0, %s67
    %s68 = sphi 0, %s65
    %s69 = sphi 0, %s68
    %s85 = sphi 0, %s69
  $region4: #{psg_conv2d.1} parent=0 // loop_header_branch
    %11 = sbr.rel (%p9) target = $region8
  $region5: #{psg_conv2d.1} parent=0 // loop_body
    %s13 = ssub.s32 %s8, 1
    %s14 = ssub.s32 %s8, 2
    %s15 = sadd.s32 %s8, 1
    %s16 = ssub.s32 %s8, %s15
    %p17 = scmp.eq.s32.totalorder %s16, 0
    %s19 = sadd.s32 %s18, 1
    %s20 = scalar_select %p17, %s18, %s19
    %p23 = pneg %p17
    %p24 = scmp.eq.s32.totalorder %s8, 1
    %p25 = por %p23, %p24
    %p26 = scmp.ne.s32.totalorder %s18, %s21
    %p27 = scmp.eq.s32.totalorder %s8, 0
    %p28 = por %p26, %p27
    %p29 = scmp.ne.s32.totalorder %s18, %s21
    %p30 = scmp.eq.s32.totalorder %s13, 1
    %p31 = por %p29, %p30
    %p32 = scmp.ne.s32.totalorder %s21, %s22
    %p33 = scmp.eq.s32.totalorder %s13, 0
    %p34 = por %p32, %p33
    %p35 = scmp.ne.s32.totalorder %s21, %s22
    %p36 = scmp.eq.s32.totalorder %s14, 1
    %p37 = por %p35, %p36
    %p39 = scmp.ne.s32.totalorder %s22, %s38
    %p40 = scmp.eq.s32.totalorder %s14, 0
    %p41 = por %p39, %p40
    %s43 = sadd.s32 %s42, 1
    %p46 = scmp.eq.s32.totalorder %s8, 1
    %p47 = scmp.ne.s32.totalorder %s42, %s44
    %p48 = scmp.eq.s32.totalorder %s8, 0
    %p49 = por %p47, %p48
    %p50 = scmp.ne.s32.totalorder %s42, %s44
    %p51 = scmp.eq.s32.totalorder %s13, 1
    %p52 = por %p50, %p51
    %p53 = scmp.ne.s32.totalorder %s44, %s45
    %p54 = scmp.eq.s32.totalorder %s13, 0
    %p55 = por %p53, %p54
    %p56 = scmp.ne.s32.totalorder %s44, %s45
    %p57 = scmp.eq.s32.totalorder %s14, 1
    %p58 = por %p56, %p57
    %p60 = scmp.ne.s32.totalorder %s45, %s59
    %p61 = scmp.eq.s32.totalorder %s14, 0
    %p62 = por %p60, %p61
    %s63 = ssub.s32 %s8, %s15
    %p64 = scmp.eq.s32.totalorder %s63, 0
    %s66 = sadd.s32 %s65, 1
    %s67 = scalar_select %p64, %s65, %s66
    %p70 = pneg %p64
    %p71 = scmp.eq.s32.totalorder %s8, 1
    %p72 = por %p70, %p71
    %p73 = scmp.ne.s32.totalorder %s65, %s68
    %p74 = scmp.eq.s32.totalorder %s8, 0
    %p75 = por %p73, %p74
    %p76 = scmp.ne.s32.totalorder %s65, %s68
    %p77 = scmp.eq.s32.totalorder %s13, 1
    %p78 = por %p76, %p77
    %p79 = scmp.ne.s32.totalorder %s68, %s69
    %p80 = scmp.eq.s32.totalorder %s13, 0
    %p81 = por %p79, %p80
    %p82 = scmp.ne.s32.totalorder %s68, %s69
    %p83 = scmp.eq.s32.totalorder %s14, 1
    %p84 = por %p82, %p83
    %p86 = scmp.ne.s32.totalorder %s69, %s85
    %p87 = scmp.eq.s32.totalorder %s14, 0
    %p88 = por %p86, %p87
    %p89 = scmp.le.s32.totalorder 1, %s8
    %p90 = scmp.lt.s32.totalorder %s8, 3
    %p91 = pnand %p89, %p90
    %p92 = pneg %p91
    // Predicated region
    $region9: #{psg_conv2d.1} parent=5 // pred_check
      _
    $region10: #{psg_conv2d.1} parent=5 // pred_check_branch
      %94 = sbr.rel (%p91) target = $region12
    $region11: #{psg_conv2d.1} parent=5 // pred_region
      %s95 = ssub.s32 %s8, 1
      // Predicated region
      $region13: #{psg_conv2d.1} parent=11 // pred_check
        %p96 = pneg %p55
      $region14: #{psg_conv2d.1} parent=11 // pred_check_branch
        %98 = sbr.rel (%p96) target = $region16
      $region15: #{psg_conv2d.1} parent=11 // pred_region
        _
      $region16: #{psg_conv2d.1} parent=11 // pred_fallthru
        _
    $region12: #{psg_conv2d.1} parent=5 // pred_fallthru
      _
    %p99 = scmp.lt.s32.totalorder %s8, 2
    // Predicated region
    $region17: #{psg_conv2d.1} parent=5 // pred_check
      %p100 = pneg %p99
    $region18: #{psg_conv2d.1} parent=5 // pred_check_branch
      %102 = sbr.rel (%p100) target = $region20
    $region19: #{psg_conv2d.1} parent=5 // pred_region
      // Predicated region
      $region21: #{psg_conv2d.1} parent=19 // pred_check
        %p103 = pneg %p28
      $region22: #{psg_conv2d.1} parent=19 // pred_check_branch
        %105 = sbr.rel (%p103) target = $region24
      $region23: #{psg_conv2d.1} parent=19 // pred_region
        %p106 = scmp.lt.s32.totalorder %s8, 1
        %s107 = scalar_select %p106, %s8, 1
        %s108 = smul.addr %s107, 34
        %s109 = smul.addr %s108, 4
        %s110 = scalar_lea.vmem %s0, %s109
      $region24: #{psg_conv2d.1} parent=19 // pred_fallthru
        _
    $region20: #{psg_conv2d.1} parent=5 // pred_fallthru
      _
    %p111 = scmp.le.s32.totalorder 1, %s8
    %p112 = scmp.lt.s32.totalorder %s8, 3
    %p113 = pnand %p111, %p112
    %p114 = pneg %p113
    // Predicated region
    $region25: #{psg_conv2d.1} parent=5 // pred_check
      _
    $region26: #{psg_conv2d.1} parent=5 // pred_check_branch
      %116 = sbr.rel (%p113) target = $region28
    $region27: #{psg_conv2d.1} parent=5 // pred_region
      %s117 = ssub.s32 %s8, 1
      %p118 = scmp.lt.s32.totalorder %s13, 1
      %s119 = scalar_select %p118, %s13, 1
      %s120 = smul.addr %s119, 34
      %s121 = smul.addr %s120, 4
      %s122 = scalar_lea.vmem %s0, %s121
      %p123 = pneg %p34
      %p124 = pneg %p31
      %p125 = pneg %p55
      %p126 = pneg %p52
      %p127 = pneg %p81
      %p128 = pneg %p78
      %p129 = scmp.lt.s32.totalorder %s13, 1
      %s130 = scalar_select %p129, %s13, 1
      %s131 = smul.addr %s130, 2
      %s132 = smul.addr %s131, 8
      %s133 = scalar_lea.vmem %s2, %s132
      %p134 = scmp.lt.s32.totalorder %s13, 1
      %s135 = scalar_select %p134, %s13, 1
      %s136 = smul.addr %s135, 34
      %s137 = smul.addr %s136, 4
      %s138 = scalar_lea.vmem %s0, %s137
      %p139 = scmp.lt.s32.totalorder %s13, 1
      %s140 = scalar_select %p139, %s13, 1
      %s141 = smul.addr %s140, 2
      %s142 = smul.addr %s141, 8
      %s143 = scalar_lea.vmem %s2, %s142
      %v145 = vld [vmem:[%s1] sm:$0xff]
      %v146 = vld [vmem:[%s138] sm:$0xff]
      %v147 = vld [vmem:[%s138 + $0x8] sm:$0xff]
      %v148 = vld [vmem:[%s138 + $0x10] sm:$0xff]
      %v149 = vld [vmem:[%s138 + $0x18] sm:$0xff]
      %v150 = vld [vmem:[%s138 + $0x20] sm:$0xff]
      %v151 = vld [vmem:[%s138 + $0x28] sm:$0xff]
      %v152 = vld [vmem:[%s138 + $0x30] sm:$0xff]
      %v153 = vld [vmem:[%s138 + $0x38] sm:$0xff]
      %v154 = vld [vmem:[%s138 + $0x40] sm:$0xff]
      %v155 = vld [vmem:[%s138 + $0x48] sm:$0xff]
      %v156 = vld [vmem:[%s138 + $0x50] sm:$0xff]
      %v157 = vld [vmem:[%s138 + $0x58] sm:$0xff]
      %v158 = vld [vmem:[%s138 + $0x60] sm:$0xff]
      %v159 = vld [vmem:[%s138 + $0x68] sm:$0xff]
      %v160 = vld [vmem:[%s138 + $0x70] sm:$0xff]
      %v161 = vld [vmem:[%s138 + $0x78] sm:$0xff]
      %v162 = vld [vmem:[%s138 + $0x80] sm:$0xff]
      %v164 = vunpack.c.l.b16 %v145
      %v165 = vunpack.c.h.b16 %v145
      %v166 = vpack.c.b16 %v164, %v164
      %v167 = vpack.c.b16 %v165, %v165
      %v186 = vunpack.c.l.b16 %v146
      %v187 = vunpack.c.h.b16 %v146
      %v188 = vunpack.c.l.b16 %v147
      %v189 = vunpack.c.h.b16 %v147
      %v190 = vunpack.c.l.b16 %v148
      %v191 = vunpack.c.h.b16 %v148
      %v192 = vunpack.c.l.b16 %v149
      %v193 = vunpack.c.h.b16 %v149
      %v194 = vunpack.c.l.b16 %v150
      %v195 = vunpack.c.h.b16 %v150
      %v196 = vunpack.c.l.b16 %v151
      %v197 = vunpack.c.h.b16 %v151
      %v198 = vunpack.c.l.b16 %v152
      %v199 = vunpack.c.h.b16 %v152
      %v200 = vunpack.c.l.b16 %v153
      %v201 = vunpack.c.h.b16 %v153
      %v202 = vunpack.c.l.b16 %v154
      %v203 = vunpack.c.h.b16 %v154
      %v204 = vunpack.c.l.b16 %v155
      %v205 = vunpack.c.h.b16 %v155
      %v206 = vunpack.c.l.b16 %v156
      %v207 = vunpack.c.h.b16 %v156
      %v208 = vunpack.c.l.b16 %v157
      %v209 = vunpack.c.h.b16 %v157
      %v210 = vunpack.c.l.b16 %v158
      %v211 = vunpack.c.h.b16 %v158
      %v212 = vunpack.c.l.b16 %v159
      %v213 = vunpack.c.h.b16 %v159
      %v214 = vunpack.c.l.b16 %v160
      %v215 = vunpack.c.h.b16 %v160
      %v216 = vunpack.c.l.b16 %v161
      %v217 = vunpack.c.h.b16 %v161
      %v218 = vunpack.c.l.b16 %v162
      %v219 = vunpack.c.h.b16 %v162
      %v220 = vpack.c.b16 %v188, %v186
      %v221 = vpack.c.b16 %v189, %v187
      %v222 = vpack.c.b16 %v192, %v190
      %v223 = vpack.c.b16 %v193, %v191
      %v224 = vpack.c.b16 %v196, %v194
      %v225 = vpack.c.b16 %v197, %v195
      %v226 = vpack.c.b16 %v200, %v198
      %v227 = vpack.c.b16 %v201, %v199
      %v228 = vpack.c.b16 %v204, %v202
      %v229 = vpack.c.b16 %v205, %v203
      %v230 = vpack.c.b16 %v208, %v206
      %v231 = vpack.c.b16 %v209, %v207
      %v232 = vpack.c.b16 %v212, %v210
      %v233 = vpack.c.b16 %v213, %v211
      %v234 = vpack.c.b16 %v216, %v214
      %v235 = vpack.c.b16 %v217, %v215
      %v236 = vpack.c.b16 %v218, %v218
      %v237 = vpack.c.b16 %v219, %v219
      %vm254 = vcmask 64512
      %v256 = vsel %vm254, %v167, 0
      %vm258 = vcmask 1043456
      %v260 = vsel %vm258, %v236, 0
      %v263 = vsel %vm258, %v237, 0
      %265 = vmatpush.bf16.msra.mxu0 %v234
      %266 = vmatpush.bf16.msra.mxu0 %v232
      %267 = vmatpush.bf16.msra.mxu0 %v230
      %268 = vmatpush.bf16.msra.mxu0 %v228
      %269 = vmatpush.bf16.msra.mxu0 %v226
      %270 = vmatpush.bf16.msra.mxu0 %v224
      %271 = vmatpush.bf16.msra.mxu0 %v222
      %272 = vmatpush.bf16.msra.mxu0 %v220
      %273 = vmatmul.bf16.gmra.mxu0 %v166
      %v274 = vpop.f32.mrf.mxu0
      %v275 = vadd.f32 0.0, %v274
      %v276 = vpop.f32.mrf.mxu0
      %277 = vdwg.mxu0
      %278 = vmatpush.bf16.msra.mxu0 0
      %279 = vmatpush.bf16.msra.mxu0 0
      %280 = vmatpush.bf16.msra.mxu0 0
      %281 = vmatpush.bf16.msra.mxu0 0
      %282 = vmatpush.bf16.msra.mxu0 0
      %283 = vmatpush.bf16.msra.mxu0 0
      %284 = vmatpush.bf16.msra.mxu0 0
      %285 = vmatpush.bf16.msra.mxu0 %v260
      %286 = vmatmul.bf16.gmra.mxu0 %v256
      %v287 = vpop.f32.mrf.mxu0
      %v288 = vadd.f32 %v275, %v287
      %v289 = vpop.f32.mrf.mxu0
      %290 = vdwg.mxu0
      %291 = vmatpush.bf16.msra.mxu0 %v235
      %292 = vmatpush.bf16.msra.mxu0 %v233
      %293 = vmatpush.bf16.msra.mxu0 %v231
      %294 = vmatpush.bf16.msra.mxu0 %v229
      %295 = vmatpush.bf16.msra.mxu0 %v227
      %296 = vmatpush.bf16.msra.mxu0 %v225
      %297 = vmatpush.bf16.msra.mxu0 %v223
      %298 = vmatpush.bf16.msra.mxu0 %v221
      %299 = vmatmul.bf16.gmra.mxu0 %v166
      %v300 = vpop.f32.mrf.mxu0
      %v301 = vadd.f32 0.0, %v300
      %v302 = vpop.f32.mrf.mxu0
      %303 = vdwg.mxu0
      %304 = vmatpush.bf16.msra.mxu0 0
      %305 = vmatpush.bf16.msra.mxu0 0
      %306 = vmatpush.bf16.msra.mxu0 0
      %307 = vmatpush.bf16.msra.mxu0 0
      %308 = vmatpush.bf16.msra.mxu0 0
      %309 = vmatpush.bf16.msra.mxu0 0
      %310 = vmatpush.bf16.msra.mxu0 0
      %311 = vmatpush.bf16.msra.mxu0 %v263
      %312 = vmatmul.bf16.gmra.mxu0 %v256
      %v313 = vpop.f32.mrf.mxu0
      %v314 = vadd.f32 %v301, %v313
      %v315 = vpop.f32.mrf.mxu0
      %316 = vdwg.mxu0
      %317 = vst [vmem:[%s143] sm:$0xff] %v288
      %318 = vst [vmem:[%s143 + $0x8] sm:$0xff] %v314
      %p319 = scmp.lt.s32.totalorder %s13, 1
      %s320 = scalar_select %p319, %s13, 1
      %s321 = smul.addr %s320, 2
      %s322 = smul.addr %s321, 8
      %s323 = scalar_lea.vmem %s2, %s322
      // Predicated region
      $region29: #{psg_conv2d.1} parent=27 // pred_check
        %p324 = pneg %p78
      $region30: #{psg_conv2d.1} parent=27 // pred_check_branch
        %326 = sbr.rel (%p324) target = $region32
      $region31: #{psg_conv2d.1} parent=27 // pred_region
        _
      $region32: #{psg_conv2d.1} parent=27 // pred_fallthru
        _
    $region28: #{psg_conv2d.1} parent=5 // pred_fallthru
      _
    %p327 = scmp.le.s32.totalorder 2, %s8
    // Predicated region
    $region33: #{psg_conv2d.1} parent=5 // pred_check
      %p328 = pneg %p327
    $region34: #{psg_conv2d.1} parent=5 // pred_check_branch
      %330 = sbr.rel (%p328) target = $region36
    $region35: #{psg_conv2d.1} parent=5 // pred_region
      %s331 = ssub.s32 %s8, 2
      // Predicated region
      $region37: #{psg_conv2d.1} parent=35 // pred_check
        %p332 = pneg %p84
      $region38: #{psg_conv2d.1} parent=35 // pred_check_branch
        %334 = sbr.rel (%p332) target = $region40
      $region39: #{psg_conv2d.1} parent=35 // pred_region
        %p335 = scmp.lt.s32.totalorder %s14, 1
        %s336 = scalar_select %p335, %s14, 1
        %s337 = smul.addr %s336, 2
        %s338 = smul.addr %s337, 8
        %s339 = scalar_lea.vmem %s2, %s338
      $region40: #{psg_conv2d.1} parent=35 // pred_fallthru
        _
    $region36: #{psg_conv2d.1} parent=5 // pred_fallthru
      _
  $region6: #{psg_conv2d.1} parent=0 // loop_footer
    %s12 = sadd.s32 1, %s8
  $region7: #{psg_conv2d.1} parent=0 // loop_footer_branch
    %7 = sbr.rel target = $region3
  $region8: #{psg_conv2d.1} parent=0 // loop_exit
    _

</llo_original>
